<compile_context>
chip_gen: v7x
topology: tpu7x:2x2x1
jax: 0.10.0
libtpu: 0.0.40
codegen_flags: <defaults>
</compile_context>

<pallas_src>
import jax
import jax.numpy as jnp
from jax.experimental import pallas as pl
from jax.experimental.pallas import tpu as pltpu


def _copy_kernel(x_ref, o_ref):
    # Straight vld/vst stream: no broadcast_in_dim, no reshape in-kernel.
    o_ref[...] = x_ref[...]


_LANE_WIDTHS = (4096, 2048, 1024, 512, 256, 128)


def _vmem_capacity_bytes():
    # Trace-time hardware query; conservative (v7x-sized) fallback if the
    # query is unavailable so vmem_limit_bytes never exceeds physical VMEM.
    try:
        info = pltpu.get_tpu_info()
        cap = getattr(info, "vmem_capacity_bytes", None)
        if cap:
            return int(cap)
    except Exception:
        pass
    return 64 * 1024 * 1024


def _pick_lane_width(total):
    # Largest lane-dense width (multiple of 128) dividing `total`; prefer a
    # width that also leaves >= 8 rows so the sublane dim is dense too.
    best = None
    for cols in _LANE_WIDTHS:
        if total % cols == 0:
            if best is None:
                best = cols
            if total // cols >= 8:
                return cols
    return best


def _pick_row_block(rows, cols, itemsize, block_cap_bytes, sub):
    """Largest row block under the VMEM block cap; sublane-dense (multiple of
    `sub`) or full-extent.  Never returns a block exceeding the cap for large
    arrays — awkward row counts use a cdiv grid with a clamped tail block."""
    max_rows = max(1, block_cap_bytes // max(1, cols * itemsize))
    if rows <= max_rows:
        return rows                                   # full-extent block(s)
    # Largest divisor of rows <= max_rows that is a multiple of `sub`.
    for cand in range(min(rows, max_rows), 0, -1):
        if rows % cand == 0 and cand % sub == 0:
            return cand
    # No clean divisor (e.g. prime rows): largest multiple of `sub` under the
    # cap; caller uses pl.cdiv and Pallas clamps/masks the short tail block.
    rb = (max_rows // sub) * sub
    return max(rb, min(sub, rows), 1)


def _pallas_copy(x, out_shape_5d):
    """Identity copy via Pallas over a 2-D slab, then metadata reshape back."""
    total = int(x.size)
    itemsize = x.dtype.itemsize
    # dtype-aware sublane multiple: 8 (f32) / 16 (bf16) / 32 (int8/fp8).
    sub = max(1, (8 * 4) // itemsize)

    cols = _pick_lane_width(total)
    if cols is not None:
        rows = total // cols
    else:
        # Total not a multiple of 128 (e.g. canonical 1x244x28x28 f32).  Keep
        # the product of the last two dims as the lane axis; full-extent dims
        # are exempt from the (8,128) rule, so this still lowers cleanly
        # (lane tail is masked, but it remains one streaming pass).
        if x.ndim >= 2:
            cols = int(x.shape[-1] * x.shape[-2])
            rows = total // cols
        else:
            cols, rows = total, 1

    flat = jnp.reshape(x, (rows, cols))               # metadata-only

    # Generation-aware block sizing: big blocks ride the HBM roofline
    # (~16 MiB on v5e/v6e with 128 MiB VMEM, ~8 MiB on v7x with 64 MiB).
    vmem_cap = _vmem_capacity_bytes()
    block_cap = (16 << 20) if vmem_cap >= (96 << 20) else (8 << 20)
    row_block = _pick_row_block(rows, cols, itemsize, block_cap, sub)

    # v7x megacore: the "parallel" axis only buys anything with >= 2 blocks.
    total_bytes = total * itemsize
    if total_bytes >= (4 << 20) and pl.cdiv(rows, row_block) < 2 and rows >= 2 * sub:
        half = (((rows + 1) // 2) + sub - 1) // sub * sub
        row_block = min(row_block, max(sub, half))

    num_blocks = pl.cdiv(rows, row_block)

    # Scoped VMEM budget: double-buffered input + output blocks (padded to
    # the physical (sub,128) tile) plus headroom, capped below physical VMEM.
    padded_cols = -(-cols // 128) * 128
    padded_rows = -(-row_block // sub) * sub
    block_bytes = padded_rows * padded_cols * itemsize
    vmem_limit = int(min(0.75 * vmem_cap, 4 * block_bytes + (8 << 20)))
    vmem_limit = max(vmem_limit, 32 << 20)

    spec = pl.BlockSpec((row_block, cols), lambda i: (i, 0))
    out = pl.pallas_call(
        _copy_kernel,
        out_shape=jax.ShapeDtypeStruct((rows, cols), x.dtype),
        grid=(num_blocks,),
        in_specs=[spec],
        out_specs=spec,
        compiler_params=pltpu.CompilerParams(
            dimension_semantics=("parallel",),        # disjoint output slabs
            vmem_limit_bytes=vmem_limit,
        ),
        cost_estimate=pl.CostEstimate(
            flops=0,
            transcendentals=0,
            bytes_accessed=int(2 * rows * cols * itemsize),
        ),
    )(flat)
    return jnp.reshape(out, out_shape_5d)             # metadata-only


def channel_split_view(x, n, groups, cpg, h, w, use_pallas=False):
    """Equivalent of torch's x.view(n, groups, cpg, h, w) for contiguous x of
    shape (n, groups*cpg, h, w)."""
    assert x.shape == (n, groups * cpg, h, w)
    out_shape = (n, groups, cpg, h, w)
    if not use_pallas:
        # .view() on contiguous NCHW data is pure metadata; XLA lowers this
        # reshape to a bitcast with zero HBM traffic (dominant optimization).
        return jnp.reshape(x, out_shape)
    return _pallas_copy(x, out_shape)


class M:
    """JAX port of the PyTorch module M (forward = view/reshape)."""

    def __init__(self, use_pallas=False):
        self.use_pallas = use_pallas

    def __call__(self, x62, x64, x68, x66, x67):
        # x69 = x62.view(x64, 2, x68, x66, x67)
        return channel_split_view(
            x62, x64, 2, x68, x66, x67, use_pallas=self.use_pallas
        )


if __name__ == "__main__":
    key = jax.random.PRNGKey(0)

    # Small shapes consistent with the module's forward
    # (canonical: (1, 244, 28, 28) -> view(1, 2, 122, 28, 28)).
    cases = [
        (1, 4, 16, 16),   # total % 128 == 0 -> lane-dense slab path
        (1, 3, 14, 14),   # total % 128 != 0 -> full-extent fallback path
                          # (mirrors the canonical 1x244x28x28 case)
    ]

    m_reshape = M(use_pallas=False)
    m_pallas = M(use_pallas=True)

    for (n, cpg, h, w) in cases:
        key, subkey = jax.random.split(key)
        x62 = jax.random.normal(subkey, (n, 2 * cpg, h, w), dtype=jnp.float32)
        x64, x68, x66, x67 = n, cpg, h, w

        # reference: plain reshape (exactly what torch .view does)
        ref = jnp.reshape(x62, (x64, 2, x68, x66, x67))

        out_reshape = jax.block_until_ready(m_reshape(x62, x64, x68, x66, x67))
        out_pallas = jax.block_until_ready(m_pallas(x62, x64, x68, x66, x67))

        assert out_reshape.shape == (x64, 2, x68, x66, x67)
        assert out_pallas.shape == (x64, 2, x68, x66, x67)
        assert out_pallas.dtype == x62.dtype
        assert jnp.array_equal(out_reshape, ref)
        assert jnp.array_equal(out_pallas, ref)

    print("KERNEL_OK")
</pallas_src>

<mosaic_0001>
module attributes {stable_mosaic.version = 11 : i64} {
  func.func @_copy_kernel(%arg0: i32, %arg1: memref<8x256xf32, #tpu.memory_space<vmem>>, %arg2: memref<8x256xf32, #tpu.memory_space<vmem>>) attributes {dimension_semantics = [#tpu.dimension_semantics<parallel>], iteration_bounds = array<i64: 1>, scalar_prefetch = 0 : i64, scratch_operands = 0 : i64, tpu.core_type = #tpu.core_type<tc>, window_params = [{transform_indices = @transform_0, window_bounds = array<i64: 8, 256>}, {transform_indices = @transform_1, window_bounds = array<i64: 8, 256>}]} {
    %c0 = arith.constant 0 : index
    %c0_0 = arith.constant 0 : index
    %0 = vector.load %arg1[%c0, %c0_0] : memref<8x256xf32, #tpu.memory_space<vmem>>, vector<8x256xf32>
    %c0_1 = arith.constant 0 : index
    %c0_2 = arith.constant 0 : index
    %1 = vector.load %arg2[%c0_1, %c0_2] : memref<8x256xf32, #tpu.memory_space<vmem>>, vector<8x256xf32>
    tpu.vector_store %arg2[%c0_1, %c0_2], %0 {strides = array<i32>} : memref<8x256xf32, #tpu.memory_space<vmem>>, vector<8x256xf32>,
    return
  }
  func.func @transform_0(%arg0: i32) -> (i32, i32) {
    %c0_i32 = arith.constant 0 : i32
    %c0_i32_0 = arith.constant 0 : i32
    return %arg0, %c0_i32 : i32, i32
  }
  func.func @transform_1(%arg0: i32) -> (i32, i32) {
    %c0_i32 = arith.constant 0 : i32
    %c0_i32_0 = arith.constant 0 : i32
    return %arg0, %c0_i32 : i32, i32
  }
}

</mosaic_0001>

<llo_original>
// kernel: tpu_custom_call.1
$region0: #{tpu_custom_call.1}
  #allocation0 [shape = 'u32[]', space=smem, size = 0x4, offset = 0x4, fixed_abs, tag = 'smem constant byte address 0x4 - core index']
  #allocation1 [shape = 'u32[144,128]{1,0:T(1,128)}', space=vmem, size = 0x12000, scoped, tag = 'internal scratch']
  %s0 = inlined_call_operand.hbm [shape: f32[8,256], index: 0, kind: input, shape index: {}]
  %s1 = inlined_call_operand.hbm [shape: f32[8,256], index: 1, kind: output, shape index: {}]
  %s2 = sld [smem:[#allocation0]]
  $region18: #{tpu_custom_call.1} parent=0
    _
  %s4 = ssub.s32 1, %s2
  %s5 = scalar_select 0, %s4, %s2
  $region1: #{tpu_custom_call.1} parent=0
    #allocation2 [shape = 'u8[8192]{0}', space=vmem, size = 0x2000, scoped, tag = 'input window, operand 0, single buffered']
    #allocation3 [shape = 's32[1]{0}', space=sflag, size = 0x4, scoped, tag = 'scoped memory for tpu_custom_call.1']
    #allocation4 [shape = 's32[1]{0}', space=sflag, size = 0x4, scoped, tag = 'scoped memory for tpu_custom_call.1']
    #allocation5 [shape = 'u8[8192]{0}', space=vmem, size = 0x2000, scoped, tag = 'output window, operand 0, single buffered']
    %6 = vsyncpa [#allocation3], 0
    %7 = vsyncpa [#allocation4], 0
    // Predicated region
    $region2: #{tpu_custom_call.1} parent=1 // pred_check
      _
    $region3: #{tpu_custom_call.1} parent=1 // pred_check_branch
      %9 = sbr.rel (0) target = $region5
    $region4: #{tpu_custom_call.1} parent=1 // pred_region
      %s11 = ssub.s32 256, 256
      %12 = vsyncadd [#allocation3], %s11
      %s14 = sshll.u32 [#allocation2], 4
      %s15 = int_to_ptr.vmem [resolvable:$true] %s14
      %17 = dma.hbm_to_vmem [thread:$0]  %s0, 256, %s15, [#allocation3]
    $region5: #{tpu_custom_call.1} parent=1 // pred_fallthru
      _
    // Predicated region
    $region6: #{tpu_custom_call.1} parent=1 // pred_check
      _
    $region7: #{tpu_custom_call.1} parent=1 // pred_check_branch
      %19 = sbr.rel (0) target = $region9
    $region8: #{tpu_custom_call.1} parent=1 // pred_region
      %20 = dma.done [#allocation3], 256
    $region9: #{tpu_custom_call.1} parent=1 // pred_fallthru
      _
    %v21 = vld [vmem:[#allocation2] sm:$0xff]
    %v22 = vld [vmem:[#allocation2 + $0x8] sm:$0xff]
    %23 = vst [vmem:[#allocation5] sm:$0xff] %v21
    %24 = vst [vmem:[#allocation5 + $0x8] sm:$0xff] %v22
    // Predicated region
    $region10: #{tpu_custom_call.1} parent=1 // pred_check
      _
    $region11: #{tpu_custom_call.1} parent=1 // pred_check_branch
      %26 = sbr.rel (0) target = $region13
    $region12: #{tpu_custom_call.1} parent=1 // pred_region
      %s28 = ssub.s32 256, 256
      %29 = vsyncadd [#allocation4], %s28
      %s31 = sshll.u32 [#allocation5], 4
      %s32 = int_to_ptr.vmem [resolvable:$true] %s31
      %34 = dma.vmem_to_hbm [thread:$0]  %s32, 256, %s1, [#allocation4]
    $region13: #{tpu_custom_call.1} parent=1 // pred_fallthru
      _
    // Predicated region
    $region14: #{tpu_custom_call.1} parent=1 // pred_check
      _
    $region15: #{tpu_custom_call.1} parent=1 // pred_check_branch
      %36 = sbr.rel (0) target = $region17
    $region16: #{tpu_custom_call.1} parent=1 // pred_region
      %37 = dma.done [#allocation4], 256
    $region17: #{tpu_custom_call.1} parent=1 // pred_fallthru
      _
    %38 = vsyncpa [#allocation3], 1
    %39 = vsyncpa [#allocation4], 1

</llo_original>
